<compile_context>
chip_gen: v7x
topology: tpu7x:2x2x1
jax: 0.10.0
libtpu: 0.0.40
codegen_flags: <defaults>
</compile_context>

<pallas_src>
import jax
import jax.numpy as jnp
from jax import lax
from jax.experimental import pallas as pl
from jax.experimental.pallas import tpu as pltpu


def _round_up(n, m):
    return ((n + m - 1) // m) * m


def _round_down(n, m):
    return (n // m) * m


def _mlp_kernel(x_ref, w1_ref, b1_ref, w2t_ref, b2_ref, ot_ref):
    dot_dtype = w1_ref.dtype  # f32 by default (bf16 if matmul_dtype=bf16)
    # fc1: (TB, D) @ (D, Hp) -> (TB, Hp), f32 accumulation on the MXU.
    h = jnp.dot(x_ref[...].astype(dot_dtype), w1_ref[...],
                preferred_element_type=jnp.float32)
    # bias + ReLU in f32 on the VPU.
    h = jnp.maximum(h + b1_ref[...], 0.0)
    # fc2, transposed output: (Op, Hp) x (TB, Hp) contracting Hp -> (Op, TB).
    # Lane axis of the result is the batch -> lane-dense, unmasked stores.
    out_t = lax.dot_general(w2t_ref[...], h.astype(dot_dtype),
                            dimension_numbers=(((1,), (1,)), ((), ())),
                            preferred_element_type=jnp.float32)
    ot_ref[...] = (out_t + b2_ref[...]).astype(ot_ref.dtype)


def feedforward_nn(x, w1, b1, w2, b2, *, block_b=4096,
                   matmul_dtype=jnp.float32, min_pallas_batch=1024):
    """Forward pass of FeedForwardNN.

    x  : (B, input_size) float32
    w1 : (input_size, hidden) float32   (transposed vs torch fc1.weight)
    b1 : (hidden,) or (1, hidden) float32
    w2 : (hidden, out) float32          (transposed vs torch fc2.weight)
    b2 : (out,) or (1, out) float32
    returns (B, out) float32
    """
    B, D = x.shape
    H = w1.shape[1]
    O = w2.shape[1]
    b1v = jnp.asarray(b1, jnp.float32).reshape(1, H)
    b2v = jnp.asarray(b2, jnp.float32).reshape(O, 1)

    # Small-batch fallback: launch overhead + layout plumbing dominate; XLA's
    # fused path is faster below ~1K rows.
    if B < min_pallas_batch:
        return jnp.maximum(x @ w1 + b1v, 0.0) @ w2 + b2v.reshape(1, O)

    # --- parameter prep (tiny, done once per call) -------------------------
    Hp = _round_up(max(H, 128), 128)   # lane-pad hidden dim (zero pad: exact)
    Op = _round_up(O, 8)               # sublane-pad output rows of out^T

    w1p = jnp.pad(w1, ((0, 0), (0, Hp - H))).astype(matmul_dtype)
    b1p = jnp.pad(b1v, ((0, 0), (0, Hp - H)))                       # (1, Hp) f32
    w2t = jnp.pad(w2.T, ((0, Op - O), (0, Hp - H))).astype(matmul_dtype)  # (Op, Hp)
    b2c = jnp.pad(b2v, ((0, Op - O), (0, 0)))                       # (Op, 1) f32

    # --- batch tiling (no padding of x; ragged last tile is clipped) -------
    tb_cap = max(128, _round_down(block_b, 128))
    tb = min(tb_cap, _round_down(B, 128))
    if tb == 0:
        tb = B                      # tiny batch: one block covering the array
    elif tb >= B and B >= 256:
        # guarantee >= 2 grid steps so v7x megacore uses both TensorCores
        tb = max(128, _round_up(B // 2, 128))
    grid = (pl.cdiv(B, tb),)

    itemsize = lambda a: jnp.dtype(a.dtype).itemsize
    cost = pl.CostEstimate(
        flops=2 * B * D * Hp + 2 * B * Hp * Op,
        transcendentals=0,
        bytes_accessed=(x.size * itemsize(x) + w1p.size * itemsize(w1p)
                        + w2t.size * itemsize(w2t) + b1p.size * 4
                        + b2c.size * 4 + Op * B * 4),
    )

    out_t = pl.pallas_call(
        _mlp_kernel,
        out_shape=jax.ShapeDtypeStruct((Op, B), jnp.float32),
        grid_spec=pltpu.PrefetchScalarGridSpec(
            num_scalar_prefetch=0,
            grid=grid,
            in_specs=[
                pl.BlockSpec((tb, D), lambda i: (i, 0)),    # x: pipelined tiles
                pl.BlockSpec((D, Hp), lambda i: (0, 0)),    # w1: VMEM-resident
                pl.BlockSpec((1, Hp), lambda i: (0, 0)),    # b1: VMEM-resident
                pl.BlockSpec((Op, Hp), lambda i: (0, 0)),   # w2^T: VMEM-resident
                pl.BlockSpec((Op, 1), lambda i: (0, 0)),    # b2 col: VMEM-resident
            ],
            out_specs=pl.BlockSpec((Op, tb), lambda i: (0, i)),
        ),
        compiler_params=pltpu.CompilerParams(
            dimension_semantics=("parallel",),
            vmem_limit_bytes=32 * 1024 * 1024,
        ),
        cost_estimate=cost,
    )(x, w1p, b1p, w2t, b2c)

    # Tiny (O, B) slice + transpose back to the PyTorch layout.
    return out_t[:O, :].T


def init_params(key, input_size, hidden_size=64, out_size=2):
    """Deterministic init mimicking torch nn.Linear defaults U(-1/sqrt(fan_in), +)."""
    k1, k2, k3, k4 = jax.random.split(key, 4)
    bound1 = 1.0 / jnp.sqrt(jnp.float32(input_size))
    bound2 = 1.0 / jnp.sqrt(jnp.float32(hidden_size))
    w1 = jax.random.uniform(k1, (input_size, hidden_size), jnp.float32, -bound1, bound1)
    b1 = jax.random.uniform(k2, (1, hidden_size), jnp.float32, -bound1, bound1)
    w2 = jax.random.uniform(k3, (hidden_size, out_size), jnp.float32, -bound2, bound2)
    b2 = jax.random.uniform(k4, (1, out_size), jnp.float32, -bound2, bound2)
    return w1, b1, w2, b2


if __name__ == "__main__":
    key = jax.random.PRNGKey(0)
    kx, kx2, kp = jax.random.split(key, 3)

    input_size = 32   # stands in for X_train.shape[1]
    hidden_size = 64
    w1, b1, w2, b2 = init_params(kp, input_size, hidden_size)

    # X_train = np.log(X_train) in the original pipeline: positive inputs + log.
    # 1) Small batch, forced through the Pallas kernel (single-tile path).
    batch = 8
    x = jnp.log(jax.random.uniform(kx, (batch, input_size), jnp.float32, 0.5, 2.0))
    out = feedforward_nn(x, w1, b1, w2, b2, min_pallas_batch=0)
    jax.block_until_ready(out)
    ref = jnp.maximum(x @ w1 + b1, 0.0) @ w2 + b2
    assert out.shape == (batch, 2)
    assert jnp.allclose(out, ref, atol=1e-4, rtol=1e-4), float(jnp.max(jnp.abs(out - ref)))

    # 2) Larger batch: tiled Pallas path (>=2 grid steps, ragged last block).
    batch2 = 1544
    x2 = jnp.log(jax.random.uniform(kx2, (batch2, input_size), jnp.float32, 0.5, 2.0))
    out2 = feedforward_nn(x2, w1, b1, w2, b2)
    jax.block_until_ready(out2)
    ref2 = jnp.maximum(x2 @ w1 + b1, 0.0) @ w2 + b2
    assert out2.shape == (batch2, 2)
    assert jnp.allclose(out2, ref2, atol=1e-4, rtol=1e-4), float(jnp.max(jnp.abs(out2 - ref2)))

    print("KERNEL_OK")
</pallas_src>

<mosaic_0001>
module attributes {stable_mosaic.version = 11 : i64} {
  func.func @_mlp_kernel(%arg0: i32, %arg1: memref<8x32xf32, #tpu.memory_space<vmem>>, %arg2: memref<32x128xf32, #tpu.memory_space<vmem>>, %arg3: memref<1x128xf32, #tpu.memory_space<vmem>>, %arg4: memref<8x128xf32, #tpu.memory_space<vmem>>, %arg5: memref<8x1xf32, #tpu.memory_space<vmem>>, %arg6: memref<8x8xf32, #tpu.memory_space<vmem>>) attributes {dimension_semantics = [#tpu.dimension_semantics<parallel>], iteration_bounds = array<i64: 1>, scalar_prefetch = 0 : i64, scratch_operands = 0 : i64, tpu.core_type = #tpu.core_type<tc>, window_params = [{transform_indices = @transform_0, window_bounds = array<i64: 8, 32>}, {pipeline_mode = #tpu.pipeline_mode<synchronous>, transform_indices = @transform_1, window_bounds = array<i64: 32, 128>}, {pipeline_mode = #tpu.pipeline_mode<synchronous>, transform_indices = @transform_2, window_bounds = array<i64: 1, 128>}, {pipeline_mode = #tpu.pipeline_mode<synchronous>, transform_indices = @transform_3, window_bounds = array<i64: 8, 128>}, {pipeline_mode = #tpu.pipeline_mode<synchronous>, transform_indices = @transform_4, window_bounds = array<i64: 8, 1>}, {transform_indices = @transform_5, window_bounds = array<i64: 8, 8>}]} {
    %c0 = arith.constant 0 : index
    %c0_0 = arith.constant 0 : index
    %0 = vector.load %arg1[%c0, %c0_0] : memref<8x32xf32, #tpu.memory_space<vmem>>, vector<8x32xf32>
    %c0_1 = arith.constant 0 : index
    %c0_2 = arith.constant 0 : index
    %1 = vector.load %arg2[%c0_1, %c0_2] : memref<32x128xf32, #tpu.memory_space<vmem>>, vector<32x128xf32>
    %cst = arith.constant dense<0.000000e+00> : vector<8x128xf32>
    %2 = tpu.matmul %0, %1, %cst {dimension_numbers = #tpu.dot_dimension_numbers<[1], [0], [0], [1], [0, 0, 1, 1], [], []>} : vector<8x32xf32>, vector<32x128xf32>, vector<8x128xf32> -> vector<8x128xf32>
    %c0_3 = arith.constant 0 : index
    %c0_4 = arith.constant 0 : index
    %3 = vector.load %arg3[%c0_3, %c0_4] : memref<1x128xf32, #tpu.memory_space<vmem>>, vector<1x128xf32>
    %4 = vector.broadcast %3 : vector<1x128xf32> to vector<8x128xf32>
    %5 = arith.addf %2, %4 : vector<8x128xf32>
    %cst_5 = arith.constant 0.000000e+00 : f32
    %6 = vector.broadcast %cst_5 : f32 to vector<8x128xf32>
    %7 = arith.maximumf %5, %6 : vector<8x128xf32>
    %c0_6 = arith.constant 0 : index
    %c0_7 = arith.constant 0 : index
    %8 = vector.load %arg4[%c0_6, %c0_7] : memref<8x128xf32, #tpu.memory_space<vmem>>, vector<8x128xf32>
    %cst_8 = arith.constant dense<0.000000e+00> : vector<8x8xf32>
    %9 = tpu.matmul %8, %7, %cst_8 {dimension_numbers = #tpu.dot_dimension_numbers<[1], [1], [0], [0], [0, 0, 1, 0], [], []>} : vector<8x128xf32>, vector<8x128xf32>, vector<8x8xf32> -> vector<8x8xf32>
    %c0_9 = arith.constant 0 : index
    %c0_10 = arith.constant 0 : index
    %10 = vector.load %arg5[%c0_9, %c0_10] : memref<8x1xf32, #tpu.memory_space<vmem>>, vector<8x1xf32>
    %11 = vector.broadcast %10 : vector<8x1xf32> to vector<8x8xf32>
    %12 = arith.addf %9, %11 : vector<8x8xf32>
    %c0_11 = arith.constant 0 : index
    %c0_12 = arith.constant 0 : index
    %13 = vector.load %arg6[%c0_11, %c0_12] : memref<8x8xf32, #tpu.memory_space<vmem>>, vector<8x8xf32>
    tpu.vector_store %arg6[%c0_11, %c0_12], %12 {strides = array<i32>} : memref<8x8xf32, #tpu.memory_space<vmem>>, vector<8x8xf32>,
    return
  }
  func.func @transform_0(%arg0: i32) -> (i32, i32) {
    %c0_i32 = arith.constant 0 : i32
    %c0_i32_0 = arith.constant 0 : i32
    return %arg0, %c0_i32 : i32, i32
  }
  func.func @transform_1(%arg0: i32) -> (i32, i32) {
    %c0_i32 = arith.constant 0 : i32
    %c0_i32_0 = arith.constant 0 : i32
    %c0_i32_1 = arith.constant 0 : i32
    return %c0_i32, %c0_i32_0 : i32, i32
  }
  func.func @transform_2(%arg0: i32) -> (i32, i32) {
    %c0_i32 = arith.constant 0 : i32
    %c0_i32_0 = arith.constant 0 : i32
    %c0_i32_1 = arith.constant 0 : i32
    return %c0_i32, %c0_i32_0 : i32, i32
  }
  func.func @transform_3(%arg0: i32) -> (i32, i32) {
    %c0_i32 = arith.constant 0 : i32
    %c0_i32_0 = arith.constant 0 : i32
    %c0_i32_1 = arith.constant 0 : i32
    return %c0_i32, %c0_i32_0 : i32, i32
  }
  func.func @transform_4(%arg0: i32) -> (i32, i32) {
    %c0_i32 = arith.constant 0 : i32
    %c0_i32_0 = arith.constant 0 : i32
    %c0_i32_1 = arith.constant 0 : i32
    return %c0_i32, %c0_i32_0 : i32, i32
  }
  func.func @transform_5(%arg0: i32) -> (i32, i32) {
    %c0_i32 = arith.constant 0 : i32
    %c0_i32_0 = arith.constant 0 : i32
    return %c0_i32, %arg0 : i32, i32
  }
}

</mosaic_0001>

<llo_original>
// kernel: tpu_custom_call.1
$region0: #{tpu_custom_call.1}
  #allocation0 [shape = 'u32[]', space=smem, size = 0x4, offset = 0x4, fixed_abs, tag = 'smem constant byte address 0x4 - core index']
  #allocation1 [shape = 'u32[144,128]{1,0:T(1,128)}', space=vmem, size = 0x12000, scoped, tag = 'internal scratch']
  %s0 = inlined_call_operand.vmem [shape: f32[8,32], index: 0, kind: input, shape index: {}]
  %s1 = inlined_call_operand.hbm [shape: f32[32,128], index: 1, kind: input, shape index: {}]
  %s2 = inlined_call_operand.hbm [shape: f32[1,128], index: 2, kind: input, shape index: {}]
  %s3 = inlined_call_operand.vmem [shape: f32[8,128], index: 3, kind: input, shape index: {}]
  %s4 = inlined_call_operand.vmem [shape: f32[8,1], index: 4, kind: input, shape index: {}]
  %s5 = inlined_call_operand.hbm [shape: f32[8,8], index: 5, kind: output, shape index: {}]
  %s6 = sld [smem:[#allocation0]]
  $region38: #{tpu_custom_call.1} parent=0
    _
  %s8 = ssub.s32 1, %s6
  %s9 = scalar_select 0, %s8, %s6
  $region1: #{tpu_custom_call.1} parent=0
    #allocation2 [shape = 'u8[16384]{0}', space=vmem, size = 0x4000, scoped, tag = 'input window, operand 1, single buffered']
    #allocation3 [shape = 's32[1]{0}', space=sflag, size = 0x4, scoped, tag = 'scoped memory for tpu_custom_call.1']
    #allocation4 [shape = 's32[1]{0}', space=sflag, size = 0x4, scoped, tag = 'scoped memory for tpu_custom_call.1']
    #allocation5 [shape = 'u8[512]{0}', space=vmem, size = 0x400, scoped, tag = 'input window, operand 2, single buffered']
    #allocation6 [shape = 's32[1]{0}', space=sflag, size = 0x4, scoped, tag = 'scoped memory for tpu_custom_call.1']
    #allocation7 [shape = 'u8[4096]{0}', space=vmem, size = 0x1000, scoped, tag = 'output window, operand 0, single buffered']
    %10 = vsyncpa [#allocation3], 0
    %11 = vsyncpa [#allocation6], 0
    %12 = vsyncpa [#allocation4], 0
    // Predicated region
    $region2: #{tpu_custom_call.1} parent=1 // pred_check
      _
    $region3: #{tpu_custom_call.1} parent=1 // pred_check_branch
      %14 = sbr.rel (0) target = $region5
    $region4: #{tpu_custom_call.1} parent=1 // pred_region
      _
    $region5: #{tpu_custom_call.1} parent=1 // pred_fallthru
      _
    // Predicated region
    $region6: #{tpu_custom_call.1} parent=1 // pred_check
      _
    $region7: #{tpu_custom_call.1} parent=1 // pred_check_branch
      %16 = sbr.rel (0) target = $region9
    $region8: #{tpu_custom_call.1} parent=1 // pred_region
      %s18 = ssub.s32 512, 512
      %19 = vsyncadd [#allocation3], %s18
      %s20 = sshll.u32 [#allocation2], 4
      %s21 = int_to_ptr.vmem [resolvable:$true] %s20
      %26 = dma.hbm_to_vmem [thread:$0]  %s1, 512, %s21, [#allocation3], 128, 128, 8
    $region9: #{tpu_custom_call.1} parent=1 // pred_fallthru
      _
    // Predicated region
    $region10: #{tpu_custom_call.1} parent=1 // pred_check
      _
    $region11: #{tpu_custom_call.1} parent=1 // pred_check_branch
      %28 = sbr.rel (0) target = $region13
    $region12: #{tpu_custom_call.1} parent=1 // pred_region
      %s30 = ssub.s32 16, 16
      %31 = vsyncadd [#allocation6], %s30
      %s33 = sshll.u32 [#allocation5], 4
      %s34 = int_to_ptr.vmem [resolvable:$true] %s33
      %36 = dma.hbm_to_vmem [thread:$0]  %s2, 16, %s34, [#allocation6]
    $region13: #{tpu_custom_call.1} parent=1 // pred_fallthru
      _
    // Predicated region
    $region14: #{tpu_custom_call.1} parent=1 // pred_check
      _
    $region15: #{tpu_custom_call.1} parent=1 // pred_check_branch
      %38 = sbr.rel (0) target = $region17
    $region16: #{tpu_custom_call.1} parent=1 // pred_region
      _
    $region17: #{tpu_custom_call.1} parent=1 // pred_fallthru
      _
    // Predicated region
    $region18: #{tpu_custom_call.1} parent=1 // pred_check
      _
    $region19: #{tpu_custom_call.1} parent=1 // pred_check_branch
      %40 = sbr.rel (0) target = $region21
    $region20: #{tpu_custom_call.1} parent=1 // pred_region
      _
    $region21: #{tpu_custom_call.1} parent=1 // pred_fallthru
      _
    // Predicated region
    $region22: #{tpu_custom_call.1} parent=1 // pred_check
      _
    $region23: #{tpu_custom_call.1} parent=1 // pred_check_branch
      %42 = sbr.rel (0) target = $region25
    $region24: #{tpu_custom_call.1} parent=1 // pred_region
      %43 = dma.done [#allocation3], 512
    $region25: #{tpu_custom_call.1} parent=1 // pred_fallthru
      _
    // Predicated region
    $region26: #{tpu_custom_call.1} parent=1 // pred_check
      _
    $region27: #{tpu_custom_call.1} parent=1 // pred_check_branch
      %45 = sbr.rel (0) target = $region29
    $region28: #{tpu_custom_call.1} parent=1 // pred_region
      %46 = dma.done [#allocation6], 16
    $region29: #{tpu_custom_call.1} parent=1 // pred_fallthru
      _
    %v47 = vld [vmem:[%s0] sm:$0xff]
    %v48 = vld [vmem:[#allocation2] sm:$0xff]
    %v49 = vld [vmem:[#allocation2 + $0x8] sm:$0xff]
    %v50 = vld [vmem:[#allocation2 + $0x10] sm:$0xff]
    %v51 = vld [vmem:[#allocation2 + $0x18] sm:$0xff]
    %v52 = vld [vmem:[#allocation5] sm:$0x1]
    %v54 = vlaneseq
    %v55 = vshrl.u32 %v54, 7
    %v56 = vsub.s32 0, %v55
    %v57 = vrot.slane %v52, %v56
    %vm59 = vcmask 261120
    %v61 = vsel %vm59, %v47, 0
    %63 = vmatprep.subr.mxu0 0.0
    %64 = vmatpush1.msra.mxu0 %v48
    %65 = vmatprep.subr.mxu0 0.0
    %66 = vmatpush1.msra.mxu0 %v49
    %67 = vmatprep.subr.mxu0 0.0
    %68 = vmatpush1.msra.mxu0 %v50
    %69 = vmatprep.subr.mxu0 0.0
    %70 = vmatpush1.msra.mxu0 %v51
    %71 = vmatprep.subr.mxu0 0.0
    %72 = vmatpush1.msra.mxu0 0.0
    %73 = vmatprep.subr.mxu0 0.0
    %74 = vmatpush1.msra.mxu0 0.0
    %75 = vmatprep.subr.mxu0 0.0
    %76 = vmatpush1.msra.mxu0 0.0
    %77 = vmatprep.subr.mxu0 0.0
    %78 = vmatpush1.msra.mxu0 0.0
    %79 = vmatprep.subr.mxu0 0.0
    %80 = vmatpush1.msra.mxu0 0.0
    %81 = vmatprep.subr.mxu0 0.0
    %82 = vmatpush1.msra.mxu0 0.0
    %83 = vmatprep.subr.mxu0 0.0
    %84 = vmatpush1.msra.mxu0 0.0
    %85 = vmatprep.subr.mxu0 0.0
    %86 = vmatpush1.msra.mxu0 0.0
    %87 = vmatprep.subr.mxu0 0.0
    %88 = vmatpush1.msra.mxu0 0.0
    %89 = vmatprep.subr.mxu0 0.0
    %90 = vmatpush1.msra.mxu0 0.0
    %91 = vmatprep.subr.mxu0 0.0
    %92 = vmatpush1.msra.mxu0 0.0
    %93 = vmatprep.subr.mxu0 0.0
    %94 = vmatpush1.msra.mxu0 0.0
    %95 = vmatprep.subr.mxu0 0.0
    %96 = vmatpush1.msra.mxu0 0.0
    %97 = vmatprep.subr.mxu0 0.0
    %98 = vmatpush1.msra.mxu0 0.0
    %99 = vmatprep.subr.mxu0 0.0
    %100 = vmatpush1.msra.mxu0 0.0
    %101 = vmatprep.subr.mxu0 0.0
    %102 = vmatpush1.msra.mxu0 0.0
    %103 = vmatprep.subr.mxu0 0.0
    %104 = vmatpush1.msra.mxu0 0.0
    %105 = vmatprep.subr.mxu0 0.0
    %106 = vmatpush1.msra.mxu0 0.0
    %107 = vmatprep.subr.mxu0 0.0
    %108 = vmatpush1.msra.mxu0 0.0
    %109 = vmatprep.subr.mxu0 0.0
    %110 = vmatpush1.msra.mxu0 0.0
    %111 = vmatprep.subr.mxu0 0.0
    %112 = vmatpush1.msra.mxu0 0.0
    %113 = vmatprep.subr.mxu0 0.0
    %114 = vmatpush1.msra.mxu0 0.0
    %115 = vmatprep.subr.mxu0 0.0
    %116 = vmatpush1.msra.mxu0 0.0
    %117 = vmatprep.subr.mxu0 0.0
    %118 = vmatpush1.msra.mxu0 0.0
    %119 = vmatprep.subr.mxu0 0.0
    %120 = vmatpush1.msra.mxu0 0.0
    %121 = vmatprep.subr.mxu0 0.0
    %122 = vmatpush1.msra.mxu0 0.0
    %123 = vmatprep.subr.mxu0 0.0
    %124 = vmatpush1.msra.mxu0 0.0
    %125 = vmatprep.subr.mxu0 0.0
    %126 = vmatpush1.msra.mxu0 0.0
    %127 = vmatprep.mubr.f32.mxu0 0.0
    %128 = vmatmul.mubr.f32.gmra.mrb[0].mxu0 %v61
    %v129 = vpop.f32.mrb[0].mxu0
    %v130 = vadd.f32 %v57, %v129
    %v131 = vpop.f32.mrb[0].mxu0
    %132 = vdwg.mxu0
    %v133 = vmax.f32 %v130, 0.0
    %v134 = vld [vmem:[%s3] sm:$0xff]
    %v135 = vld [vmem:[%s4] sm:$0xff]
    %137 = vset.pattern.permute.xlu0 0
    %138 = vperm.xlu0 %137, %v135
    %v139 = vpop.permute.xlu0 %138
    %141 = vmatprep.subr.mxu0 0.0
    %142 = vmatpush1.xpose.msra.mxu0 %v133
    %143 = vmatprep.subr.mxu0 0.0
    %144 = vmatpush1.xpose.msra.mxu0 0.0
    %145 = vmatprep.subr.mxu0 0.0
    %146 = vmatpush1.xpose.msra.mxu0 0.0
    %147 = vmatprep.subr.mxu0 0.0
    %148 = vmatpush1.xpose.msra.mxu0 0.0
    %149 = vmatprep.subr.mxu0 0.0
    %150 = vmatpush1.xpose.msra.mxu0 0.0
    %151 = vmatprep.subr.mxu0 0.0
    %152 = vmatpush1.xpose.msra.mxu0 0.0
    %153 = vmatprep.subr.mxu0 0.0
    %154 = vmatpush1.xpose.msra.mxu0 0.0
    %155 = vmatprep.subr.mxu0 0.0
    %156 = vmatpush1.xpose.msra.mxu0 0.0
    %157 = vmatprep.subr.mxu0 0.0
    %158 = vmatpush1.xpose.msra.mxu0 0.0
    %159 = vmatprep.subr.mxu0 0.0
    %160 = vmatpush1.xpose.msra.mxu0 0.0
    %161 = vmatprep.subr.mxu0 0.0
    %162 = vmatpush1.xpose.msra.mxu0 0.0
    %163 = vmatprep.subr.mxu0 0.0
    %164 = vmatpush1.xpose.msra.mxu0 0.0
    %165 = vmatprep.subr.mxu0 0.0
    %166 = vmatpush1.xpose.msra.mxu0 0.0
    %167 = vmatprep.subr.mxu0 0.0
    %168 = vmatpush1.xpose.msra.mxu0 0.0
    %169 = vmatprep.subr.mxu0 0.0
    %170 = vmatpush1.xpose.msra.mxu0 0.0
    %171 = vmatprep.subr.mxu0 0.0
    %172 = vmatpush1.xpose.msra.mxu0 0.0
    %173 = vmatprep.subr.mxu0 0.0
    %174 = vmatpush1.xpose.msra.mxu0 0.0
    %175 = vmatprep.subr.mxu0 0.0
    %176 = vmatpush1.xpose.msra.mxu0 0.0
    %177 = vmatprep.subr.mxu0 0.0
    %178 = vmatpush1.xpose.msra.mxu0 0.0
    %179 = vmatprep.subr.mxu0 0.0
    %180 = vmatpush1.xpose.msra.mxu0 0.0
    %181 = vmatprep.subr.mxu0 0.0
    %182 = vmatpush1.xpose.msra.mxu0 0.0
    %183 = vmatprep.subr.mxu0 0.0
    %184 = vmatpush1.xpose.msra.mxu0 0.0
    %185 = vmatprep.subr.mxu0 0.0
    %186 = vmatpush1.xpose.msra.mxu0 0.0
    %187 = vmatprep.subr.mxu0 0.0
    %188 = vmatpush1.xpose.msra.mxu0 0.0
    %189 = vmatprep.subr.mxu0 0.0
    %190 = vmatpush1.xpose.msra.mxu0 0.0
    %191 = vmatprep.subr.mxu0 0.0
    %192 = vmatpush1.xpose.msra.mxu0 0.0
    %193 = vmatprep.subr.mxu0 0.0
    %194 = vmatpush1.xpose.msra.mxu0 0.0
    %195 = vmatprep.subr.mxu0 0.0
    %196 = vmatpush1.xpose.msra.mxu0 0.0
    %197 = vmatprep.subr.mxu0 0.0
    %198 = vmatpush1.xpose.msra.mxu0 0.0
    %199 = vmatprep.subr.mxu0 0.0
    %200 = vmatpush1.xpose.msra.mxu0 0.0
    %201 = vmatprep.subr.mxu0 0.0
    %202 = vmatpush1.xpose.msra.mxu0 0.0
    %203 = vmatprep.subr.mxu0 0.0
    %204 = vmatpush1.xpose.msra.mxu0 0.0
    %205 = vmatprep.mubr.f32.mxu0 0.0
    %206 = vmatmul.mubr.f32.gmra.mrb[0].mxu0 %v134
    %v207 = vpop.f32.mrb[0].mxu0
    %v208 = vadd.f32 %v139, %v207
    %v209 = vpop.f32.mrb[0].mxu0
    %210 = vdwg.mxu0
    %vm211 = vcmask 64512
    %212 = vst.msk [vmem:[#allocation7] sm:$0xff] %vm211, %v208
    // Predicated region
    $region30: #{tpu_custom_call.1} parent=1 // pred_check
      _
    $region31: #{tpu_custom_call.1} parent=1 // pred_check_branch
      %214 = sbr.rel (0) target = $region33
    $region32: #{tpu_custom_call.1} parent=1 // pred_region
      %s216 = ssub.s32 128, 128
      %217 = vsyncadd [#allocation4], %s216
      %s219 = sshll.u32 [#allocation7], 4
      %s220 = int_to_ptr.vmem [resolvable:$true] %s219
      %222 = dma.vmem_to_hbm [thread:$0]  %s220, 128, %s5, [#allocation4]
    $region33: #{tpu_custom_call.1} parent=1 // pred_fallthru
      _
    // Predicated region
    $region34: #{tpu_custom_call.1} parent=1 // pred_check
      _
    $region35: #{tpu_custom_call.1} parent=1 // pred_check_branch
      %224 = sbr.rel (0) target = $region37
    $region36: #{tpu_custom_call.1} parent=1 // pred_region
      %225 = dma.done [#allocation4], 128
    $region37: #{tpu_custom_call.1} parent=1 // pred_fallthru
      _
    %226 = vsyncpa [#allocation3], 1
    %227 = vsyncpa [#allocation6], 1
    %228 = vsyncpa [#allocation4], 1

</llo_original>
